<compile_context>
chip_gen: v5e
topology: v5e:2x2
jax: 0.10.0
libtpu: 0.0.40
codegen_flags: <defaults>
</compile_context>

<pallas_src>
import jax
import jax.numpy as jnp
from jax.experimental import pallas as pl
from jax.experimental.pallas import tpu as pltpu


_DEFAULT_TILE_M = 2048  # rows (B*S) per grid step; always a multiple of 128


def _round_up(x, n):
    return ((x + n - 1) // n) * n


def _timegap_kernel_direct(idx_ref, wt_ref, out_ref):
    """Untransposed tile: out = one_hot(idx) @ W^T, E on lanes.

    idx_ref : (TILE_M, C) int32   -- per-row component indices, pre-offset into
                                     [0, input_size); padded rows hold -1.
    wt_ref  : (K, E)              -- transposed Linear weight (compute dtype).
    out_ref : (TILE_M, E)         -- direct output tile (E % 128 == 0).
    """
    tile_m, n_comp = idx_ref.shape
    k = wt_ref.shape[0]
    idx = idx_ref[...]                                             # (TILE_M, C)
    iota = jax.lax.broadcasted_iota(jnp.int32, (tile_m, k), 1)     # K on lanes
    hit = iota == idx[:, 0:1]
    for ci in range(1, n_comp):                                    # static, <= 3
        hit = jnp.logical_or(hit, iota == idx[:, ci:ci + 1])
    one_hot = hit.astype(wt_ref.dtype)                             # (TILE_M, K)
    out_ref[...] = jnp.dot(
        one_hot, wt_ref[...], preferred_element_type=jnp.float32
    ).astype(out_ref.dtype)


def _timegap_kernel_transposed(idx_ref, w_ref, out_ref):
    """Transposed tile (fallback when E % 128 != 0): lanes = TILE_M.

    idx_ref : (C, TILE_M) int32
    w_ref   : (E, K)      -- Linear weight as-is (compute dtype).
    out_ref : (E, TILE_M) -- transposed output tile.
    """
    n_comp, tile_m = idx_ref.shape
    k = w_ref.shape[1]
    idx = idx_ref[...]                                             # (C, TILE_M)
    iota = jax.lax.broadcasted_iota(jnp.int32, (k, tile_m), 0)     # K on sublanes
    hit = iota == idx[0:1, :]
    for ci in range(1, n_comp):
        hit = jnp.logical_or(hit, iota == idx[ci:ci + 1, :])
    oh_t = hit.astype(w_ref.dtype)                                 # (K, TILE_M)
    out_ref[...] = jnp.dot(
        w_ref[...], oh_t, preferred_element_type=jnp.float32
    ).astype(out_ref.dtype)


def _pick_tile_m(m, k, e, *, w_bytes, out_bytes, requested):
    """Tile rows: >=2 grid steps when possible (v7x 2 TCs), VMEM-budgeted."""
    tile = min(requested, max(128, _round_up(pl.cdiv(m, 2), 128)))
    tile = max(128, (tile // 128) * 128)
    k_pad = _round_up(k, 128)
    budget = 13 * 1024 * 1024  # fits default scoped VMEM on all gens (v5e 16 MiB)

    def vmem_bytes(t):
        one_hot = 2 * k_pad * t * 4        # bool mask + one-hot value slab (f32 bound)
        idx = 2 * t * 128 * 4              # double-buffered index tile (lane-padded)
        out = 2 * e * t * out_bytes        # double-buffered output tile
        wgt = e * k_pad * w_bytes          # single-buffered resident weight
        return one_hot + idx + out + wgt

    while tile > 128 and vmem_bytes(tile) > budget:
        tile -= 128
    return tile


def time_gap2_forward(rgap, sgap, pcount, weight,
                      num_rgap, num_sgap, num_pcount,
                      *, tile_m=_DEFAULT_TILE_M,
                      compute_dtype=None, out_dtype=None):
    """JAX/Pallas equivalent of timeGap2.forward.

    rgap/sgap/pcount: integer index arrays (ignored when the matching num_* is 0;
      all active ones must share a shape).
    weight: (emb_size, input_size), as in torch.nn.Linear(bias=False),
      input_size = num_rgap + num_sgap + num_pcount.
    compute_dtype: e.g. jnp.bfloat16 for MXU-native matmul (weight rounded to
      bf16; one-hot is exact).  Default: weight.dtype (exact).
    out_dtype: output dtype; default weight.dtype.
    Returns: rgap.shape + (emb_size,).
    """
    emb_size, input_size = weight.shape
    assert input_size == num_rgap + num_sgap + num_pcount
    if input_size == 0:
        raise ValueError("timeGap2 needs at least one non-zero num_* count")
    compute_dtype = weight.dtype if compute_dtype is None else jnp.dtype(compute_dtype)
    out_dtype = weight.dtype if out_dtype is None else jnp.dtype(out_dtype)

    # Flatten active components and pre-add the concat offsets so the kernel
    # builds a single one-hot of width input_size (one fused dot).
    idx_rows = []
    batch_shape = None
    off = 0
    for idx, n in ((rgap, num_rgap), (sgap, num_sgap), (pcount, num_pcount)):
        if n != 0:
            if batch_shape is None:
                batch_shape = idx.shape
            else:
                assert idx.shape == batch_shape, "active components must share a shape"
            idx_rows.append(jnp.reshape(idx, (-1,)).astype(jnp.int32) + off)
            off += n
    m = 1
    for d in batch_shape:
        m *= d
    c = len(idx_rows)

    tile = _pick_tile_m(m, input_size, emb_size,
                        w_bytes=jnp.dtype(compute_dtype).itemsize,
                        out_bytes=jnp.dtype(out_dtype).itemsize,
                        requested=tile_m)
    m_pad = _round_up(m, tile)
    grid = (m_pad // tile,)
    cparams = pltpu.CompilerParams(dimension_semantics=("parallel",),
                                   vmem_limit_bytes=32 * 1024 * 1024)

    if emb_size % 128 == 0:
        # Direct (M, E) layout: lane-dense stores, no wrapper transpose.
        idx_mc = jnp.stack(idx_rows, axis=1)                       # (M, C)
        if m_pad != m:
            idx_mc = jnp.pad(idx_mc, ((0, m_pad - m), (0, 0)), constant_values=-1)
        wt = weight.T.astype(compute_dtype)                        # (K, E)
        out = pl.pallas_call(
            _timegap_kernel_direct,
            out_shape=jax.ShapeDtypeStruct((m_pad, emb_size), out_dtype),
            grid=grid,
            in_specs=[
                pl.BlockSpec((tile, c), lambda i: (i, 0)),
                pl.BlockSpec((input_size, emb_size), lambda i: (0, 0),
                             pipeline_mode=pl.Buffered(1)),
            ],
            out_specs=pl.BlockSpec((tile, emb_size), lambda i: (i, 0)),
            compiler_params=cparams,
        )(idx_mc, wt)
        out = out[:m]
    else:
        # Transposed (E, M) layout: lanes = TILE_M; wrapper transposes back.
        idx_cm = jnp.stack(idx_rows, axis=0)                       # (C, M)
        if m_pad != m:
            idx_cm = jnp.pad(idx_cm, ((0, 0), (0, m_pad - m)), constant_values=-1)
        w = weight.astype(compute_dtype)                           # (E, K)
        out_t = pl.pallas_call(
            _timegap_kernel_transposed,
            out_shape=jax.ShapeDtypeStruct((emb_size, m_pad), out_dtype),
            grid=grid,
            in_specs=[
                pl.BlockSpec((c, tile), lambda i: (0, i)),
                pl.BlockSpec((emb_size, input_size), lambda i: (0, 0),
                             pipeline_mode=pl.Buffered(1)),
            ],
            out_specs=pl.BlockSpec((emb_size, tile), lambda i: (0, i)),
            compiler_params=cparams,
        )(idx_cm, w)
        out = out_t[:, :m].T                                       # layout plumbing only
    return out.reshape(batch_shape + (emb_size,))


def _reference_forward(rgap, sgap, pcount, weight,
                       num_rgap, num_sgap, num_pcount):
    """Pure-JAX reference matching the PyTorch module exactly."""
    infs = []
    if num_rgap != 0:
        infs.append(jax.nn.one_hot(rgap, num_rgap, dtype=weight.dtype))
    if num_sgap != 0:
        infs.append(jax.nn.one_hot(sgap, num_sgap, dtype=weight.dtype))
    if num_pcount != 0:
        infs.append(jax.nn.one_hot(pcount, num_pcount, dtype=weight.dtype))
    tg = jnp.concatenate(infs, axis=-1)
    return tg @ weight.T


def _make_inputs(key, b, s, num_rgap, num_sgap, num_pcount, emb_size):
    input_size = num_rgap + num_sgap + num_pcount
    k_w, k_r, k_s, k_p = jax.random.split(key, 4)
    bound = 1.0 / (input_size ** 0.5)
    weight = jax.random.uniform(k_w, (emb_size, input_size), jnp.float32,
                                minval=-bound, maxval=bound)
    rgap = jax.random.randint(k_r, (b, s), 0, max(num_rgap, 1), dtype=jnp.int32)
    sgap = jax.random.randint(k_s, (b, s), 0, max(num_sgap, 1), dtype=jnp.int32)
    pcount = jax.random.randint(k_p, (b, s), 0, max(num_pcount, 1), dtype=jnp.int32)
    return weight, rgap, sgap, pcount


if __name__ == "__main__":
    B, S = 2, 8
    num_rgap, num_sgap, num_pcount = 5, 7, 4
    key = jax.random.PRNGKey(0)
    k1, k2 = jax.random.split(key, 2)

    # Case 1: emb_size = 32 (not a multiple of 128) -> transposed-store path.
    w32, rg, sg, pc = _make_inputs(k1, B, S, num_rgap, num_sgap, num_pcount, 32)
    out1 = jax.block_until_ready(
        time_gap2_forward(rg, sg, pc, w32, num_rgap, num_sgap, num_pcount))
    ref1 = _reference_forward(rg, sg, pc, w32, num_rgap, num_sgap, num_pcount)
    assert out1.shape == (B, S, 32), out1.shape
    assert jnp.allclose(out1, ref1, atol=1e-5, rtol=1e-5), "mismatch (transposed path)"

    # Case 2: emb_size = 256 (multiple of 128) -> direct (M, E) path, exact f32.
    w256, rg2, sg2, pc2 = _make_inputs(k2, B, S, num_rgap, num_sgap, num_pcount, 256)
    out2 = jax.block_until_ready(
        time_gap2_forward(rg2, sg2, pc2, w256, num_rgap, num_sgap, num_pcount))
    ref2 = _reference_forward(rg2, sg2, pc2, w256, num_rgap, num_sgap, num_pcount)
    assert out2.shape == (B, S, 256), out2.shape
    assert jnp.allclose(out2, ref2, atol=1e-5, rtol=1e-5), "mismatch (direct path)"

    # Case 3: direct path with bf16 MXU compute + bf16 output (loose tolerance;
    # only numeric change is bf16 rounding of the weight / output).
    out3 = jax.block_until_ready(
        time_gap2_forward(rg2, sg2, pc2, w256, num_rgap, num_sgap, num_pcount,
                          compute_dtype=jnp.bfloat16, out_dtype=jnp.bfloat16))
    assert out3.shape == (B, S, 256), out3.shape
    assert jnp.allclose(out3.astype(jnp.float32), ref2, atol=3e-2), "mismatch (bf16 path)"

    print("KERNEL_OK")
</pallas_src>

<mosaic_0001>
module attributes {stable_mosaic.version = 11 : i64} {
  func.func @_timegap_kernel_transposed(%arg0: i32, %arg1: memref<3x128xi32, #tpu.memory_space<vmem>>, %arg2: memref<32x16xf32, #tpu.memory_space<vmem>>, %arg3: memref<32x128xf32, #tpu.memory_space<vmem>>) attributes {dimension_semantics = [#tpu.dimension_semantics<parallel>], iteration_bounds = array<i64: 1>, scalar_prefetch = 0 : i64, scratch_operands = 0 : i64, tpu.core_type = #tpu.core_type<tc>, window_params = [{transform_indices = @transform_0, window_bounds = array<i64: 3, 128>}, {pipeline_mode = #tpu.pipeline_mode<synchronous>, transform_indices = @transform_1, window_bounds = array<i64: 32, 16>}, {transform_indices = @transform_2, window_bounds = array<i64: 32, 128>}]} {
    %c0 = arith.constant 0 : index
    %c0_0 = arith.constant 0 : index
    %0 = vector.load %arg1[%c0, %c0_0] : memref<3x128xi32, #tpu.memory_space<vmem>>, vector<3x128xi32>
    %1 = tpu.iota {dimensions = array<i32: 0>} : vector<16x128xi32>
    %2 = vector.extract_strided_slice %0 {offsets = [0, 0], sizes = [1, 128], strides = [1, 1]} : vector<3x128xi32> to vector<1x128xi32>
    %3 = vector.broadcast %2 : vector<1x128xi32> to vector<16x128xi32>
    %4 = arith.cmpi eq, %1, %3 : vector<16x128xi32>
    %5 = vector.extract_strided_slice %0 {offsets = [1, 0], sizes = [1, 128], strides = [1, 1]} : vector<3x128xi32> to vector<1x128xi32>
    %6 = vector.broadcast %5 : vector<1x128xi32> to vector<16x128xi32>
    %7 = arith.cmpi eq, %1, %6 : vector<16x128xi32>
    %8 = arith.ori %4, %7 : vector<16x128xi1>
    %9 = vector.extract_strided_slice %0 {offsets = [2, 0], sizes = [1, 128], strides = [1, 1]} : vector<3x128xi32> to vector<1x128xi32>
    %10 = vector.broadcast %9 : vector<1x128xi32> to vector<16x128xi32>
    %11 = arith.cmpi eq, %1, %10 : vector<16x128xi32>
    %12 = arith.ori %8, %11 : vector<16x128xi1>
    %13 = arith.extui %12 : vector<16x128xi1> to vector<16x128xi32>
    %14 = arith.sitofp %13 : vector<16x128xi32> to vector<16x128xf32>
    %c0_1 = arith.constant 0 : index
    %c0_2 = arith.constant 0 : index
    %15 = vector.load %arg2[%c0_1, %c0_2] : memref<32x16xf32, #tpu.memory_space<vmem>>, vector<32x16xf32>
    %cst = arith.constant dense<0.000000e+00> : vector<32x128xf32>
    %16 = tpu.matmul %15, %14, %cst {dimension_numbers = #tpu.dot_dimension_numbers<[1], [0], [0], [1], [0, 0, 1, 1], [], []>} : vector<32x16xf32>, vector<16x128xf32>, vector<32x128xf32> -> vector<32x128xf32>
    %c0_3 = arith.constant 0 : index
    %c0_4 = arith.constant 0 : index
    %17 = vector.load %arg3[%c0_3, %c0_4] : memref<32x128xf32, #tpu.memory_space<vmem>>, vector<32x128xf32>
    tpu.vector_store %arg3[%c0_3, %c0_4], %16 {strides = array<i32>} : memref<32x128xf32, #tpu.memory_space<vmem>>, vector<32x128xf32>,
    return
  }
  func.func @transform_0(%arg0: i32) -> (i32, i32) {
    %c0_i32 = arith.constant 0 : i32
    %c0_i32_0 = arith.constant 0 : i32
    return %c0_i32, %arg0 : i32, i32
  }
  func.func @transform_1(%arg0: i32) -> (i32, i32) {
    %c0_i32 = arith.constant 0 : i32
    %c0_i32_0 = arith.constant 0 : i32
    %c0_i32_1 = arith.constant 0 : i32
    return %c0_i32, %c0_i32_0 : i32, i32
  }
  func.func @transform_2(%arg0: i32) -> (i32, i32) {
    %c0_i32 = arith.constant 0 : i32
    %c0_i32_0 = arith.constant 0 : i32
    return %c0_i32, %arg0 : i32, i32
  }
}

</mosaic_0001>

<llo_original>
// kernel: tpu_custom_call.1
$region0: #{tpu_custom_call.1}
  #allocation0 [shape = 'u32[]', space=smem, size = 0x4, offset = 0x4, fixed_abs, tag = 'smem constant byte address 0x4 - core index']
  #allocation1 [shape = 'u32[72,128]{1,0:T(1,128)}', space=vmem, size = 0x9000, scoped, tag = 'internal scratch']
  %s0 = inlined_call_operand.vmem [shape: s32[3,128], index: 0, kind: input, shape index: {}]
  %s1 = inlined_call_operand.vmem [shape: f32[32,16], index: 1, kind: input, shape index: {}]
  %s2 = inlined_call_operand.hbm [shape: f32[32,128], index: 2, kind: output, shape index: {}]
  %s3 = sld [smem:[#allocation0]]
  $region18: #{tpu_custom_call.1} parent=0
    _
  %s5 = ssub.s32 1, %s3
  %s6 = scalar_select 0, %s5, %s3
  $region1: #{tpu_custom_call.1} parent=0
    #allocation2 [shape = 'u8[16384]{0}', space=vmem, size = 0x4000, scoped, tag = 'output window, operand 0, single buffered']
    #allocation3 [shape = 's32[1]{0}', space=sflag, size = 0x4, scoped, tag = 'scoped memory for tpu_custom_call.1']
    %7 = vsyncpa [#allocation3], 0
    // Predicated region
    $region2: #{tpu_custom_call.1} parent=1 // pred_check
      _
    $region3: #{tpu_custom_call.1} parent=1 // pred_check_branch
      %9 = sbr.rel (0) target = $region5
    $region4: #{tpu_custom_call.1} parent=1 // pred_region
      _
    $region5: #{tpu_custom_call.1} parent=1 // pred_fallthru
      _
    // Predicated region
    $region6: #{tpu_custom_call.1} parent=1 // pred_check
      _
    $region7: #{tpu_custom_call.1} parent=1 // pred_check_branch
      %11 = sbr.rel (0) target = $region9
    $region8: #{tpu_custom_call.1} parent=1 // pred_region
      _
    $region9: #{tpu_custom_call.1} parent=1 // pred_fallthru
      _
    %v12 = vld [vmem:[%s0] sm:$0x7]
    %v13 = vlaneseq
    %v14 = vshrl.u32 %v13, 7
    %v15 = vadd.s32 %v14, 8
    %v16 = vperm.slane %v12, 0
    %vm17 = vcmp.eq.s32.totalorder %v14, %v16
    %vm18 = vcmp.eq.s32.totalorder %v15, %v16
    %v19 = vperm.slane %v12, 1
    %vm20 = vcmp.eq.s32.totalorder %v14, %v19
    %vm21 = vcmp.eq.s32.totalorder %v15, %v19
    %vm22 = vmor %vm17, %vm20
    %vm23 = vmor %vm18, %vm21
    %v24 = vperm.slane %v12, 2
    %vm25 = vcmp.eq.s32.totalorder %v14, %v24
    %vm26 = vcmp.eq.s32.totalorder %v15, %v24
    %vm27 = vmor %vm22, %vm25
    %vm28 = vmor %vm23, %vm26
    %v29 = vsel %vm27, 1, 0
    %v30 = vsel %vm28, 1, 0
    %v31 = vcvt.s32.f32 %v29
    %v32 = vcvt.s32.f32 %v30
    %v33 = vld [vmem:[%s1] sm:$0xff]
    %v34 = vld [vmem:[%s1 + $0x8] sm:$0xff]
    %v35 = vld [vmem:[%s1 + $0x10] sm:$0xff]
    %v36 = vld [vmem:[%s1 + $0x18] sm:$0xff]
    %vm37 = vcmask 130048
    %v39 = vsel %vm37, %v33, 0
    %v42 = vsel %vm37, %v34, 0
    %v45 = vsel %vm37, %v35, 0
    %v48 = vsel %vm37, %v36, 0
    %50 = vmatpush.msra.mxu0 0.0
    %51 = vmatpush.msra.mxu0 0.0
    %52 = vmatpush.msra.mxu0 0.0
    %53 = vmatpush.msra.mxu0 0.0
    %54 = vmatpush.msra.mxu0 0.0
    %55 = vmatpush.msra.mxu0 0.0
    %56 = vmatpush.msra.mxu0 0.0
    %57 = vmatpush.msra.mxu0 0.0
    %58 = vmatpush.msra.mxu0 0.0
    %59 = vmatpush.msra.mxu0 0.0
    %60 = vmatpush.msra.mxu0 0.0
    %61 = vmatpush.msra.mxu0 0.0
    %62 = vmatpush.msra.mxu0 0.0
    %63 = vmatpush.msra.mxu0 0.0
    %64 = vmatpush.msra.mxu0 %v32
    %65 = vmatpush.msra.mxu0 %v31
    %66 = vmatmul.f32.gmra.mxu0 %v39
    %v67 = vpop.f32.mrf.mxu0
    %v68 = vadd.f32 0.0, %v67
    %69 = vmatmul.f32.gmra.mxu0 %v42
    %v70 = vpop.f32.mrf.mxu0
    %v71 = vadd.f32 0.0, %v70
    %72 = vmatmul.f32.gmra.mxu0 %v45
    %v73 = vpop.f32.mrf.mxu0
    %v74 = vadd.f32 0.0, %v73
    %75 = vmatmul.f32.gmra.mxu0 %v48
    %v76 = vpop.f32.mrf.mxu0
    %v77 = vadd.f32 0.0, %v76
    %78 = vdwg.mxu0
    %79 = vst [vmem:[#allocation2] sm:$0xff] %v68
    %80 = vst [vmem:[#allocation2 + $0x8] sm:$0xff] %v71
    %81 = vst [vmem:[#allocation2 + $0x10] sm:$0xff] %v74
    %82 = vst [vmem:[#allocation2 + $0x18] sm:$0xff] %v77
    // Predicated region
    $region10: #{tpu_custom_call.1} parent=1 // pred_check
      _
    $region11: #{tpu_custom_call.1} parent=1 // pred_check_branch
      %84 = sbr.rel (0) target = $region13
    $region12: #{tpu_custom_call.1} parent=1 // pred_region
      %86 = vsyncadd [#allocation3], 0
      %s87 = sshll.u32 [#allocation2], 4
      %s88 = int_to_ptr.vmem [resolvable:$true] %s87
      %s89 = sshll.u32 %s2, 4
      %s90 = int_to_ptr.hbm [resolvable:$true] %s89
      %95 = dma.vmem_to_hbm [thread:$0]  %s88, 512, %s90, [#allocation3], 128, 128, 8
    $region13: #{tpu_custom_call.1} parent=1 // pred_fallthru
      _
    // Predicated region
    $region14: #{tpu_custom_call.1} parent=1 // pred_check
      _
    $region15: #{tpu_custom_call.1} parent=1 // pred_check_branch
      %97 = sbr.rel (0) target = $region17
    $region16: #{tpu_custom_call.1} parent=1 // pred_region
      %99 = dma.done [#allocation3], 512
    $region17: #{tpu_custom_call.1} parent=1 // pred_fallthru
      _
    %100 = vsyncpa [#allocation3], 1

</llo_original>
